<compile_context>
chip_gen: v7x
topology: tpu7x:2x2x1
jax: 0.10.0
libtpu: 0.0.40
codegen_flags: <defaults>
</compile_context>

<pallas_src>
import functools

import jax
import jax.numpy as jnp
from jax.experimental import pallas as pl
from jax.experimental.pallas import tpu as pltpu

# route -> block (uni, uni, uni, bi, bi, bi, tri)
_BLOCK_OF_ROUTE = jnp.array([0, 0, 0, 1, 1, 1, 2], dtype=jnp.int32)


# --------------------------------------------------------------------------
# Tiled, memory-bound kernel: out[b, c] = sum_r logits[b, r, c] * w[r]
# --------------------------------------------------------------------------
def _mm_routing_kernel(w_ref, logits_ref, out_ref):
    # w_ref      : (7, 1)  f32, same block on every grid step
    # logits_ref : (TB, 7, TC)
    # out_ref    : (TB, TC)
    w = w_ref[...]                                    # (7, 1) f32
    x = logits_ref[...].astype(jnp.float32)           # (TB, 7, TC)
    out_ref[...] = jnp.sum(x * w[None, :, :], axis=1).astype(out_ref.dtype)


def _choose_tiles(B, C):
    """Pick (TB, TC) so a double-buffered input tile stays in a few MiB and
    the lane dim stays as wide as possible (full C, or a multiple of 128)."""
    if C <= 2048:
        TC = C                      # full lane extent (block dim == array dim)
    else:
        TC = 2048                   # large multiple of 128
    # ~2 MiB per f32 input block: TB * 7 * TC * 4 bytes
    max_elems = (2 * 1024 * 1024) // (7 * 4)
    TB = max(1, max_elems // max(TC, 1))
    if TB >= B:
        TB = B                      # block dim == array dim, always legal
    else:
        TB = max(8, (TB // 8) * 8)  # keep second-minor dim 8-aligned
    return TB, TC


def mm_routing(route_logits, route_losses, *, alpha: float = 1.0):
    """Pallas implementation of MMRouting.forward.

    Args:
      route_logits: (B, 7, C) array.
      route_losses: (7,) array.
    Returns:
      (final_logits (B, C), route_w (7,), block_w (3,))
    """
    B, R, C = route_logits.shape
    if R != 7:
        raise ValueError(f"Expected 7 routes; got {R}")
    if route_losses.size != 7:
        raise ValueError("route_losses must have 7 elements.")

    out_dtype = route_logits.dtype

    # ---- tiny scalar work, hoisted out of the tiled kernel (fp32) ----------
    losses = route_losses.astype(jnp.float32).reshape(7)
    # min-subtraction is algebraically identical to exp(-a*x)/sum but stable.
    e = jnp.exp(-alpha * (losses - jnp.min(losses)))
    route_w = e / jnp.sum(e)                                          # (7,)
    block_losses = jnp.stack(
        [jnp.mean(losses[0:3]), jnp.mean(losses[3:6]), losses[6]])    # (3,)
    be = jnp.exp(-alpha * (block_losses - jnp.min(block_losses)))
    block_w = be / jnp.sum(be)                                        # (3,)
    combined_w = (route_w * block_w[_BLOCK_OF_ROUTE]).reshape(7, 1)   # (7,1) f32

    # ---- tiled, pipelined reduction over routes ----------------------------
    TB, TC = _choose_tiles(B, C)
    grid = (pl.cdiv(B, TB), pl.cdiv(C, TC))

    final = pl.pallas_call(
        _mm_routing_kernel,
        grid=grid,
        out_shape=jax.ShapeDtypeStruct((B, C), out_dtype),
        in_specs=[
            # small constant weight tile, same block every step
            pl.BlockSpec((7, 1), lambda i, j: (0, 0)),
            pl.BlockSpec((TB, 7, TC), lambda i, j: (i, 0, j)),
        ],
        out_specs=pl.BlockSpec((TB, TC), lambda i, j: (i, j)),
        compiler_params=pltpu.CompilerParams(
            dimension_semantics=("parallel", "parallel")),
    )(combined_w, route_logits)

    return final, route_w.astype(out_dtype), block_w.astype(out_dtype)


# --------------------------------------------------------------------------
# Pure-JAX reference replicating the PyTorch forward exactly.
# --------------------------------------------------------------------------
def _reference(route_logits, route_losses, alpha=1.0):
    losses = route_losses.astype(jnp.float32)
    e = jnp.exp(-alpha * losses)
    route_w = e / jnp.sum(e)
    block_losses = jnp.stack([
        jnp.mean(losses[0:3]),
        jnp.mean(losses[3:6]),
        losses[6],
    ])
    be = jnp.exp(-alpha * block_losses)
    block_w = be / jnp.sum(be)
    weighted = route_logits.astype(jnp.float32) * route_w.reshape(1, -1, 1)
    uni = weighted[:, 0:3, :].sum(1)
    bi = weighted[:, 3:6, :].sum(1)
    tri = weighted[:, 6:7, :].sum(1)
    final = jnp.stack([uni, bi, tri], 1) * block_w.reshape(1, -1, 1)
    return (final.sum(1).astype(route_logits.dtype),
            route_w.astype(route_logits.dtype),
            block_w.astype(route_logits.dtype))


if __name__ == "__main__":
    key = jax.random.PRNGKey(0)
    k1, k2 = jax.random.split(key)

    B, C = 2, 16
    route_logits = jax.random.normal(k1, (B, 7, C), dtype=jnp.float32)
    route_losses = jax.random.uniform(k2, (7,), dtype=jnp.float32,
                                      minval=0.1, maxval=2.0)

    final, route_w, block_w = mm_routing(route_logits, route_losses, alpha=1.0)
    jax.block_until_ready((final, route_w, block_w))

    ref_final, ref_rw, ref_bw = _reference(route_logits, route_losses, 1.0)
    assert jnp.allclose(final, ref_final, rtol=1e-5, atol=1e-5)
    assert jnp.allclose(route_w, ref_rw, rtol=1e-5, atol=1e-6)
    assert jnp.allclose(block_w, ref_bw, rtol=1e-5, atol=1e-6)

    print("KERNEL_OK")
</pallas_src>

<mosaic_0001>
module attributes {stable_mosaic.version = 11 : i64} {
  func.func @_mm_routing_kernel(%arg0: i32, %arg1: i32, %arg2: memref<7x1xf32, #tpu.memory_space<vmem>>, %arg3: memref<2x7x16xf32, #tpu.memory_space<vmem>>, %arg4: memref<2x16xf32, #tpu.memory_space<vmem>>) attributes {dimension_semantics = [#tpu.dimension_semantics<parallel>, #tpu.dimension_semantics<parallel>], iteration_bounds = array<i64: 1, 1>, scalar_prefetch = 0 : i64, scratch_operands = 0 : i64, tpu.core_type = #tpu.core_type<tc>, window_params = [{pipeline_mode = #tpu.pipeline_mode<synchronous>, transform_indices = @transform_0, window_bounds = array<i64: 7, 1>}, {transform_indices = @transform_1, window_bounds = array<i64: 2, 7, 16>}, {transform_indices = @transform_2, window_bounds = array<i64: 2, 16>}]} {
    %c0 = arith.constant 0 : index
    %c0_0 = arith.constant 0 : index
    %0 = vector.load %arg2[%c0, %c0_0] : memref<7x1xf32, #tpu.memory_space<vmem>>, vector<7x1xf32>
    %c0_1 = arith.constant 0 : index
    %c0_2 = arith.constant 0 : index
    %c0_3 = arith.constant 0 : index
    %1 = vector.load %arg3[%c0_1, %c0_2, %c0_3] : memref<2x7x16xf32, #tpu.memory_space<vmem>>, vector<2x7x16xf32>
    %2 = vector.shape_cast %0 : vector<7x1xf32> to vector<1x7x1xf32>
    %3 = vector.broadcast %2 : vector<1x7x1xf32> to vector<2x7x16xf32>
    %4 = arith.mulf %1, %3 : vector<2x7x16xf32>
    %cst = arith.constant dense<0.000000e+00> : vector<2x16xf32>
    %5 = vector.multi_reduction <add>, %4, %cst [1] : vector<2x7x16xf32> to vector<2x16xf32>
    %c0_4 = arith.constant 0 : index
    %c0_5 = arith.constant 0 : index
    %6 = vector.load %arg4[%c0_4, %c0_5] : memref<2x16xf32, #tpu.memory_space<vmem>>, vector<2x16xf32>
    tpu.vector_store %arg4[%c0_4, %c0_5], %5 {strides = array<i32>} : memref<2x16xf32, #tpu.memory_space<vmem>>, vector<2x16xf32>,
    return
  }
  func.func @transform_0(%arg0: i32, %arg1: i32) -> (i32, i32) {
    %c0_i32 = arith.constant 0 : i32
    %c0_i32_0 = arith.constant 0 : i32
    %c0_i32_1 = arith.constant 0 : i32
    return %c0_i32, %c0_i32_0 : i32, i32
  }
  func.func @transform_1(%arg0: i32, %arg1: i32) -> (i32, i32, i32) {
    %c0_i32 = arith.constant 0 : i32
    %c0_i32_0 = arith.constant 0 : i32
    return %arg0, %c0_i32, %arg1 : i32, i32, i32
  }
  func.func @transform_2(%arg0: i32, %arg1: i32) -> (i32, i32) {
    %c0_i32 = arith.constant 0 : i32
    return %arg0, %arg1 : i32, i32
  }
}

</mosaic_0001>

<llo_original>
// kernel: tpu_custom_call.1
$region0: #{tpu_custom_call.1}
  #allocation0 [shape = 'u32[]', space=smem, size = 0x4, offset = 0x4, fixed_abs, tag = 'smem constant byte address 0x4 - core index']
  #allocation1 [shape = 'u32[144,128]{1,0:T(1,128)}', space=vmem, size = 0x12000, scoped, tag = 'internal scratch']
  %s0 = inlined_call_operand.vmem [shape: f32[7,1], index: 0, kind: input, shape index: {}]
  %s1 = inlined_call_operand.vmem [shape: f32[2,7,16], index: 1, kind: input, shape index: {}]
  %s2 = inlined_call_operand.hbm [shape: f32[2,16], index: 2, kind: output, shape index: {}]
  %s3 = sld [smem:[#allocation0]]
  $region18: #{tpu_custom_call.1} parent=0
    _
  %s5 = ssub.s32 1, %s3
  %s6 = scalar_select 0, %s5, %s3
  $region1: #{tpu_custom_call.1} parent=0
    #allocation2 [shape = 'u8[1024]{0}', space=vmem, size = 0x400, scoped, tag = 'output window, operand 0, single buffered']
    #allocation3 [shape = 's32[1]{0}', space=sflag, size = 0x4, scoped, tag = 'scoped memory for tpu_custom_call.1']
    %7 = vsyncpa [#allocation3], 0
    // Predicated region
    $region2: #{tpu_custom_call.1} parent=1 // pred_check
      _
    $region3: #{tpu_custom_call.1} parent=1 // pred_check_branch
      %9 = sbr.rel (0) target = $region5
    $region4: #{tpu_custom_call.1} parent=1 // pred_region
      _
    $region5: #{tpu_custom_call.1} parent=1 // pred_fallthru
      _
    // Predicated region
    $region6: #{tpu_custom_call.1} parent=1 // pred_check
      _
    $region7: #{tpu_custom_call.1} parent=1 // pred_check_branch
      %11 = sbr.rel (0) target = $region9
    $region8: #{tpu_custom_call.1} parent=1 // pred_region
      _
    $region9: #{tpu_custom_call.1} parent=1 // pred_fallthru
      _
    %v12 = vld [vmem:[%s0] sm:$0x7f]
    %v13 = vld [vmem:[%s1] sm:$0x7f]
    %v14 = vld [vmem:[%s1 + $0x8] sm:$0x7f]
    %16 = vset.pattern.permute.xlu0 0
    %17 = vperm.xlu0 %16, %v12
    %v18 = vpop.permute.xlu0 %17
    %v20 = vmul.f32 %v13, %v18
    %v21 = vmul.f32 %v14, %v18
    %vm22 = vcmask 129024
    %v23 = vsel %vm22, %v20, 0.0
    %v24 = vrot.slane %v23, 4
    %v25 = vadd.f32 %v23, %v24
    %v26 = vrot.slane %v25, 2
    %v27 = vadd.f32 %v25, %v26
    %v28 = vrot.slane %v27, 1
    %v29 = vadd.f32 %v27, %v28
    %v30 = vsel %vm22, %v21, 0.0
    %v31 = vrot.slane %v30, 4
    %v32 = vadd.f32 %v30, %v31
    %v33 = vrot.slane %v32, 2
    %v34 = vadd.f32 %v32, %v33
    %v35 = vrot.slane %v34, 1
    %v36 = vadd.f32 %v34, %v35
    %vm39 = vcmask 1041409
    %v40 = vsel %vm39, %v36, %v29
    %vm42 = vcmask 123904
    %43 = vst.msk [vmem:[#allocation2] sm:$0x3] %vm42, %v40
    // Predicated region
    $region10: #{tpu_custom_call.1} parent=1 // pred_check
      _
    $region11: #{tpu_custom_call.1} parent=1 // pred_check_branch
      %45 = sbr.rel (0) target = $region13
    $region12: #{tpu_custom_call.1} parent=1 // pred_region
      %s47 = ssub.s32 32, 32
      %48 = vsyncadd [#allocation3], %s47
      %s50 = sshll.u32 [#allocation2], 4
      %s51 = int_to_ptr.vmem [resolvable:$true] %s50
      %53 = dma.vmem_to_hbm [thread:$0]  %s51, 32, %s2, [#allocation3]
    $region13: #{tpu_custom_call.1} parent=1 // pred_fallthru
      _
    // Predicated region
    $region14: #{tpu_custom_call.1} parent=1 // pred_check
      _
    $region15: #{tpu_custom_call.1} parent=1 // pred_check_branch
      %55 = sbr.rel (0) target = $region17
    $region16: #{tpu_custom_call.1} parent=1 // pred_region
      %56 = dma.done [#allocation3], 32
    $region17: #{tpu_custom_call.1} parent=1 // pred_fallthru
      _
    %57 = vsyncpa [#allocation3], 1

</llo_original>
